<compile_context>
chip_gen: v5e
topology: v5e:2x2
jax: 0.10.0
libtpu: 0.0.40
codegen_flags: <defaults>
</compile_context>

<pallas_src>
import functools

import jax
import jax.numpy as jnp
from jax.experimental import pallas as pl
from jax.experimental.pallas import tpu as pltpu

_FEAT_DIM = 30   # per-client feature width
_HID_DIM = 30    # Linear(fusion_input_dim, 30)
_OUT_DIM = 18    # Linear(30, 18)

_HP = jax.lax.Precision.HIGHEST


# ----------------------------------------------------------------------------
# Kernels
# ----------------------------------------------------------------------------
def _concat_kernel(x_ref, w_ref, b_ref, o_ref):
    """x: (B, C*30) f32, w: (C*30, 18) f32, b: (1, 18) f32, o: (B, 18) f32."""
    o_ref[...] = (
        jnp.dot(x_ref[...], w_ref[...],
                preferred_element_type=jnp.float32, precision=_HP)
        + b_ref[...]
    )


def _make_sum_kernel(client_num: int):
    """x: (C, B, 30) f32, w: (30, 18) f32, b: (1, 18) f32, o: (B, 18) f32.

    x_sum = x[0] + ... + x[C-1]  (VPU adds, free slot), then ONE matmul.
    For 'mean' the 1/C scale is pre-folded into w.
    """

    def kernel(x_ref, w_ref, b_ref, o_ref):
        x_sum = x_ref[0]
        for c in range(1, client_num):          # tiny static unroll
            x_sum = x_sum + x_ref[c]
        o_ref[...] = (
            jnp.dot(x_sum, w_ref[...],
                    preferred_element_type=jnp.float32, precision=_HP)
            + b_ref[...]
        )

    return kernel


# ----------------------------------------------------------------------------
# pallas_call wrappers (jit-ed; gridless, whole-array VMEM blocks)
# ----------------------------------------------------------------------------
def _vmem_spec():
    return pl.BlockSpec(memory_space=pltpu.MemorySpace.VMEM)


def _forward_concat(input_list, w, b):
    x = jnp.concatenate(list(input_list), axis=1)          # (B, C*30)
    B, K = x.shape
    flops = 2 * B * K * _OUT_DIM
    bytes_accessed = 4 * (x.size + w.size + b.size + B * _OUT_DIM)
    return pl.pallas_call(
        _concat_kernel,
        out_shape=jax.ShapeDtypeStruct((B, _OUT_DIM), jnp.float32),
        in_specs=[_vmem_spec(), _vmem_spec(), _vmem_spec()],
        out_specs=_vmem_spec(),
        cost_estimate=pl.CostEstimate(
            flops=flops, transcendentals=0, bytes_accessed=bytes_accessed),
    )(x, w, b)


def _forward_sum(input_list, w, b, *, client_num):
    x = jnp.stack(list(input_list), axis=0)                 # (C, B, 30)
    B = x.shape[1]
    flops = 2 * B * _FEAT_DIM * _OUT_DIM + (client_num - 1) * B * _FEAT_DIM
    bytes_accessed = 4 * (x.size + w.size + b.size + B * _OUT_DIM)
    return pl.pallas_call(
        _make_sum_kernel(client_num),
        out_shape=jax.ShapeDtypeStruct((B, _OUT_DIM), jnp.float32),
        in_specs=[_vmem_spec(), _vmem_spec(), _vmem_spec()],
        out_specs=_vmem_spec(),
        cost_estimate=pl.CostEstimate(
            flops=flops, transcendentals=0, bytes_accessed=bytes_accessed),
    )(x, w, b)


# ----------------------------------------------------------------------------
# Module
# ----------------------------------------------------------------------------
class GlobalModelForKUHARPallas:
    """JAX/Pallas port of GlobalModelForKUHAR."""

    def __init__(self, client_num: int, aggregation: str, key):
        assert aggregation in ("sum", "mean", "concat")
        self.client_num = client_num
        self.aggregation = aggregation
        fusion_input_dim = (_FEAT_DIM * client_num
                            if aggregation == "concat" else _FEAT_DIM)

        k1, k2, k3, k4 = jax.random.split(key, 4)
        # torch.nn.Linear-like init; weights stored (in, out) for x @ W.
        lim1 = 1.0 / jnp.sqrt(jnp.float32(fusion_input_dim))
        lim2 = 1.0 / jnp.sqrt(jnp.float32(_HID_DIM))
        self.w1 = jax.random.uniform(
            k1, (fusion_input_dim, _HID_DIM), jnp.float32, -lim1, lim1)
        self.b1 = jax.random.uniform(k2, (_HID_DIM,), jnp.float32, -lim1, lim1)
        self.w2 = jax.random.uniform(
            k3, (_HID_DIM, _OUT_DIM), jnp.float32, -lim2, lim2)
        self.b2 = jax.random.uniform(k4, (_OUT_DIM,), jnp.float32, -lim2, lim2)

        # --- algebraic fusion (exact: no activation between the Linears) ----
        w_fused = jnp.dot(self.w1, self.w2, precision=_HP)            # (F_in, 18)
        b_fused = jnp.dot(self.b1, self.w2, precision=_HP) + self.b2  # (18,)

        if aggregation == "concat":
            self.w = w_fused                                  # (C*30, 18)
        elif aggregation == "sum":
            self.w = w_fused                                  # (30, 18)
        else:  # mean: fold the 1/C scale into the weights
            self.w = w_fused / client_num                     # (30, 18)
        self.b = b_fused.reshape(1, _OUT_DIM)                 # (1, 18)

        if aggregation == "concat":
            self._forward = jax.jit(_forward_concat)
        else:
            self._forward = jax.jit(
                functools.partial(_forward_sum, client_num=client_num))

    def __call__(self, input_list):
        return self._forward(list(input_list), self.w, self.b)


# ----------------------------------------------------------------------------
# Reference + self-test
# ----------------------------------------------------------------------------
def _reference(model, input_list):
    """Unfused two-Linear reference matching the original PyTorch module."""
    if model.aggregation == "sum":
        x = jnp.stack(input_list).sum(axis=0)
    elif model.aggregation == "mean":
        x = jnp.stack(input_list).mean(axis=0)
    else:
        x = jnp.concatenate(input_list, axis=1)
    h = jnp.dot(x, model.w1, precision=_HP) + model.b1
    return jnp.dot(h, model.w2, precision=_HP) + model.b2


if __name__ == "__main__":
    key = jax.random.PRNGKey(0)
    k_params, k_data = jax.random.split(key)

    client_num = 4
    batch = 8

    ok = True
    for aggregation in ("concat", "sum", "mean"):
        model = GlobalModelForKUHARPallas(client_num, aggregation, k_params)
        data_keys = jax.random.split(k_data, client_num)
        input_list = [
            jax.random.normal(dk, (batch, _FEAT_DIM), jnp.float32)
            for dk in data_keys
        ]

        out = model(input_list)
        out = jax.block_until_ready(out)

        ref = _reference(model, input_list)
        if out.shape != (batch, _OUT_DIM):
            ok = False
        if not jnp.allclose(out, ref, atol=1e-4, rtol=1e-4):
            ok = False

    if ok:
        print("KERNEL_OK")
    else:
        print("KERNEL_MISMATCH")
</pallas_src>

<mosaic_0001>
module attributes {stable_mosaic.version = 11 : i64} {
  func.func @_concat_kernel(%arg0: memref<8x120xf32, #tpu.memory_space<vmem>>, %arg1: memref<120x18xf32, #tpu.memory_space<vmem>>, %arg2: memref<1x18xf32, #tpu.memory_space<vmem>>, %arg3: memref<8x18xf32, #tpu.memory_space<vmem>>) attributes {dimension_semantics = [], scalar_prefetch = 0 : i64, scratch_operands = 0 : i64, tpu.core_type = #tpu.core_type<tc>} {
    %c0 = arith.constant 0 : index
    %c0_0 = arith.constant 0 : index
    %0 = vector.load %arg0[%c0, %c0_0] : memref<8x120xf32, #tpu.memory_space<vmem>>, vector<8x120xf32>
    %c0_1 = arith.constant 0 : index
    %c0_2 = arith.constant 0 : index
    %1 = vector.load %arg1[%c0_1, %c0_2] : memref<120x18xf32, #tpu.memory_space<vmem>>, vector<120x18xf32>
    %cst = arith.constant dense<0.000000e+00> : vector<8x18xf32>
    %2 = tpu.matmul %0, %1, %cst {dimension_numbers = #tpu.dot_dimension_numbers<[1], [0], [0], [1], [0, 0, 1, 1], [], []>, precision = #tpu.contract_precision<fp32>} : vector<8x120xf32>, vector<120x18xf32>, vector<8x18xf32> -> vector<8x18xf32>
    %c0_3 = arith.constant 0 : index
    %c0_4 = arith.constant 0 : index
    %3 = vector.load %arg2[%c0_3, %c0_4] : memref<1x18xf32, #tpu.memory_space<vmem>>, vector<1x18xf32>
    %4 = vector.broadcast %3 : vector<1x18xf32> to vector<8x18xf32>
    %5 = arith.addf %2, %4 : vector<8x18xf32>
    %c0_5 = arith.constant 0 : index
    %c0_6 = arith.constant 0 : index
    %6 = vector.load %arg3[%c0_5, %c0_6] : memref<8x18xf32, #tpu.memory_space<vmem>>, vector<8x18xf32>
    tpu.vector_store %arg3[%c0_5, %c0_6], %5 {strides = array<i32>} : memref<8x18xf32, #tpu.memory_space<vmem>>, vector<8x18xf32>,
    return
  }
}

</mosaic_0001>

<llo_original>
// kernel: _forward_concat.1
$region0: #{_forward_concat.1}
  #allocation0 [shape = 'u32[]', space=smem, size = 0x4, offset = 0x4, fixed_abs, tag = 'smem constant byte address 0x4 - core index']
  #allocation1 [shape = 'u32[72,128]{1,0:T(1,128)}', space=vmem, size = 0x9000, scoped, tag = 'internal scratch']
  %s0 = inlined_call_operand.vmem [shape: f32[8,120], index: 0, kind: input, shape index: {}]
  %s1 = inlined_call_operand.vmem [shape: f32[120,18], index: 1, kind: input, shape index: {}]
  %s2 = inlined_call_operand.vmem [shape: f32[1,18], index: 2, kind: input, shape index: {}]
  %s3 = inlined_call_operand.hbm [shape: f32[8,18], index: 3, kind: output, shape index: {}]
  %s4 = sld [smem:[#allocation0]]
  $region22: #{_forward_concat.1} parent=0
    _
  %s6 = ssub.s32 1, %s4
  %s7 = scalar_select 0, %s6, %s4
  $region1: #{_forward_concat.1} parent=0
    #allocation2 [shape = 'u8[4096]{0}', space=vmem, size = 0x1000, scoped, tag = 'output window, operand 0, single buffered']
    #allocation3 [shape = 's32[1]{0}', space=sflag, size = 0x4, scoped, tag = 'scoped memory for _forward_concat.1']
    %8 = vsyncpa [#allocation3], 0
    // Predicated region
    $region2: #{_forward_concat.1} parent=1 // pred_check
      _
    $region3: #{_forward_concat.1} parent=1 // pred_check_branch
      %10 = sbr.rel (0) target = $region5
    $region4: #{_forward_concat.1} parent=1 // pred_region
      _
    $region5: #{_forward_concat.1} parent=1 // pred_fallthru
      _
    // Predicated region
    $region6: #{_forward_concat.1} parent=1 // pred_check
      _
    $region7: #{_forward_concat.1} parent=1 // pred_check_branch
      %12 = sbr.rel (0) target = $region9
    $region8: #{_forward_concat.1} parent=1 // pred_region
      _
    $region9: #{_forward_concat.1} parent=1 // pred_fallthru
      _
    // Predicated region
    $region10: #{_forward_concat.1} parent=1 // pred_check
      _
    $region11: #{_forward_concat.1} parent=1 // pred_check_branch
      %14 = sbr.rel (0) target = $region13
    $region12: #{_forward_concat.1} parent=1 // pred_region
      _
    $region13: #{_forward_concat.1} parent=1 // pred_fallthru
      _
    %v15 = vld [vmem:[%s0] sm:$0xff]
    %v16 = vld [vmem:[%s1] sm:$0xff]
    %v17 = vld [vmem:[%s1 + $0x8] sm:$0xff]
    %v18 = vld [vmem:[%s1 + $0x10] sm:$0xff]
    %v19 = vld [vmem:[%s1 + $0x18] sm:$0xff]
    %v20 = vld [vmem:[%s1 + $0x20] sm:$0xff]
    %v21 = vld [vmem:[%s1 + $0x28] sm:$0xff]
    %v22 = vld [vmem:[%s1 + $0x30] sm:$0xff]
    %v23 = vld [vmem:[%s1 + $0x38] sm:$0xff]
    %v24 = vld [vmem:[%s1 + $0x40] sm:$0xff]
    %v25 = vld [vmem:[%s1 + $0x48] sm:$0xff]
    %v26 = vld [vmem:[%s1 + $0x50] sm:$0xff]
    %v27 = vld [vmem:[%s1 + $0x58] sm:$0xff]
    %v28 = vld [vmem:[%s1 + $0x60] sm:$0xff]
    %v29 = vld [vmem:[%s1 + $0x68] sm:$0xff]
    %v30 = vld [vmem:[%s1 + $0x70] sm:$0xff]
    %v31 = vld [vmem:[%s2] sm:$0x1]
    %v33 = vperm.slane %v31, 0
    %vm35 = vcmask 982016
    %v37 = vsel %vm35, %v15, 0
    %39 = vmatpush.msra.mxu0 0.0
    %v40 = vand.u32 %v30, 4294901760
    %41 = vmatpush.msra.mxu0 %v40
    %v42 = vand.u32 %v29, 4294901760
    %43 = vmatpush.msra.mxu0 %v42
    %v44 = vand.u32 %v28, 4294901760
    %45 = vmatpush.msra.mxu0 %v44
    %v46 = vand.u32 %v27, 4294901760
    %47 = vmatpush.msra.mxu0 %v46
    %v48 = vand.u32 %v26, 4294901760
    %49 = vmatpush.msra.mxu0 %v48
    %v50 = vand.u32 %v25, 4294901760
    %51 = vmatpush.msra.mxu0 %v50
    %v52 = vand.u32 %v24, 4294901760
    %53 = vmatpush.msra.mxu0 %v52
    %v54 = vand.u32 %v23, 4294901760
    %55 = vmatpush.msra.mxu0 %v54
    %v56 = vand.u32 %v22, 4294901760
    %57 = vmatpush.msra.mxu0 %v56
    %v58 = vand.u32 %v21, 4294901760
    %59 = vmatpush.msra.mxu0 %v58
    %v60 = vand.u32 %v20, 4294901760
    %61 = vmatpush.msra.mxu0 %v60
    %v62 = vand.u32 %v19, 4294901760
    %63 = vmatpush.msra.mxu0 %v62
    %v64 = vand.u32 %v18, 4294901760
    %65 = vmatpush.msra.mxu0 %v64
    %v66 = vand.u32 %v17, 4294901760
    %67 = vmatpush.msra.mxu0 %v66
    %v68 = vand.u32 %v16, 4294901760
    %69 = vmatpush.msra.mxu0 %v68
    %v70 = vand.u32 %v37, 4294901760
    %v71 = vsub.f32 %v37, %v70
    %v72 = vand.u32 %v71, 4294901760
    %v73 = vsub.f32 %v71, %v72
    %v74 = vand.u32 %v73, 4294901760
    %75 = vmatmul.f32.gmra.mxu0 %v74
    %v76 = vpop.f32.mrf.mxu0
    %v77 = vadd.f32 %v33, %v76
    %78 = vdwg.mxu0
    %79 = vmatpush.msra.mxu0 0.0
    %v80 = vand.u32 %v30, 4294901760
    %v81 = vsub.f32 %v30, %v80
    %v82 = vand.u32 %v81, 4294901760
    %v83 = vsub.f32 %v81, %v82
    %v84 = vand.u32 %v83, 4294901760
    %85 = vmatpush.msra.mxu0 %v84
    %v86 = vand.u32 %v29, 4294901760
    %v87 = vsub.f32 %v29, %v86
    %v88 = vand.u32 %v87, 4294901760
    %v89 = vsub.f32 %v87, %v88
    %v90 = vand.u32 %v89, 4294901760
    %91 = vmatpush.msra.mxu0 %v90
    %v92 = vand.u32 %v28, 4294901760
    %v93 = vsub.f32 %v28, %v92
    %v94 = vand.u32 %v93, 4294901760
    %v95 = vsub.f32 %v93, %v94
    %v96 = vand.u32 %v95, 4294901760
    %97 = vmatpush.msra.mxu0 %v96
    %v98 = vand.u32 %v27, 4294901760
    %v99 = vsub.f32 %v27, %v98
    %v100 = vand.u32 %v99, 4294901760
    %v101 = vsub.f32 %v99, %v100
    %v102 = vand.u32 %v101, 4294901760
    %103 = vmatpush.msra.mxu0 %v102
    %v104 = vand.u32 %v26, 4294901760
    %v105 = vsub.f32 %v26, %v104
    %v106 = vand.u32 %v105, 4294901760
    %v107 = vsub.f32 %v105, %v106
    %v108 = vand.u32 %v107, 4294901760
    %109 = vmatpush.msra.mxu0 %v108
    %v110 = vand.u32 %v25, 4294901760
    %v111 = vsub.f32 %v25, %v110
    %v112 = vand.u32 %v111, 4294901760
    %v113 = vsub.f32 %v111, %v112
    %v114 = vand.u32 %v113, 4294901760
    %115 = vmatpush.msra.mxu0 %v114
    %v116 = vand.u32 %v24, 4294901760
    %v117 = vsub.f32 %v24, %v116
    %v118 = vand.u32 %v117, 4294901760
    %v119 = vsub.f32 %v117, %v118
    %v120 = vand.u32 %v119, 4294901760
    %121 = vmatpush.msra.mxu0 %v120
    %v122 = vand.u32 %v23, 4294901760
    %v123 = vsub.f32 %v23, %v122
    %v124 = vand.u32 %v123, 4294901760
    %v125 = vsub.f32 %v123, %v124
    %v126 = vand.u32 %v125, 4294901760
    %127 = vmatpush.msra.mxu0 %v126
    %v128 = vand.u32 %v22, 4294901760
    %v129 = vsub.f32 %v22, %v128
    %v130 = vand.u32 %v129, 4294901760
    %v131 = vsub.f32 %v129, %v130
    %v132 = vand.u32 %v131, 4294901760
    %133 = vmatpush.msra.mxu0 %v132
    %v134 = vand.u32 %v21, 4294901760
    %v135 = vsub.f32 %v21, %v134
    %v136 = vand.u32 %v135, 4294901760
    %v137 = vsub.f32 %v135, %v136
    %v138 = vand.u32 %v137, 4294901760
    %139 = vmatpush.msra.mxu0 %v138
    %v140 = vand.u32 %v20, 4294901760
    %v141 = vsub.f32 %v20, %v140
    %v142 = vand.u32 %v141, 4294901760
    %v143 = vsub.f32 %v141, %v142
    %v144 = vand.u32 %v143, 4294901760
    %145 = vmatpush.msra.mxu0 %v144
    %v146 = vand.u32 %v19, 4294901760
    %v147 = vsub.f32 %v19, %v146
    %v148 = vand.u32 %v147, 4294901760
    %v149 = vsub.f32 %v147, %v148
    %v150 = vand.u32 %v149, 4294901760
    %151 = vmatpush.msra.mxu0 %v150
    %v152 = vand.u32 %v18, 4294901760
    %v153 = vsub.f32 %v18, %v152
    %v154 = vand.u32 %v153, 4294901760
    %v155 = vsub.f32 %v153, %v154
    %v156 = vand.u32 %v155, 4294901760
    %157 = vmatpush.msra.mxu0 %v156
    %v158 = vand.u32 %v17, 4294901760
    %v159 = vsub.f32 %v17, %v158
    %v160 = vand.u32 %v159, 4294901760
    %v161 = vsub.f32 %v159, %v160
    %v162 = vand.u32 %v161, 4294901760
    %163 = vmatpush.msra.mxu0 %v162
    %v164 = vand.u32 %v16, 4294901760
    %v165 = vsub.f32 %v16, %v164
    %v166 = vand.u32 %v165, 4294901760
    %v167 = vsub.f32 %v165, %v166
    %v168 = vand.u32 %v167, 4294901760
    %169 = vmatpush.msra.mxu0 %v168
    %v170 = vand.u32 %v37, 4294901760
    %171 = vmatmul.f32.gmra.mxu0 %v170
    %v172 = vpop.f32.mrf.mxu0
    %v173 = vadd.f32 %v77, %v172
    %174 = vdwg.mxu0
    %175 = vmatpush.msra.mxu0 0.0
    %v176 = vand.u32 %v30, 4294901760
    %v177 = vsub.f32 %v30, %v176
    %178 = vmatpush.msra.mxu0 %v177
    %v179 = vand.u32 %v29, 4294901760
    %v180 = vsub.f32 %v29, %v179
    %181 = vmatpush.msra.mxu0 %v180
    %v182 = vand.u32 %v28, 4294901760
    %v183 = vsub.f32 %v28, %v182
    %184 = vmatpush.msra.mxu0 %v183
    %v185 = vand.u32 %v27, 4294901760
    %v186 = vsub.f32 %v27, %v185
    %187 = vmatpush.msra.mxu0 %v186
    %v188 = vand.u32 %v26, 4294901760
    %v189 = vsub.f32 %v26, %v188
    %190 = vmatpush.msra.mxu0 %v189
    %v191 = vand.u32 %v25, 4294901760
    %v192 = vsub.f32 %v25, %v191
    %193 = vmatpush.msra.mxu0 %v192
    %v194 = vand.u32 %v24, 4294901760
    %v195 = vsub.f32 %v24, %v194
    %196 = vmatpush.msra.mxu0 %v195
    %v197 = vand.u32 %v23, 4294901760
    %v198 = vsub.f32 %v23, %v197
    %199 = vmatpush.msra.mxu0 %v198
    %v200 = vand.u32 %v22, 4294901760
    %v201 = vsub.f32 %v22, %v200
    %202 = vmatpush.msra.mxu0 %v201
    %v203 = vand.u32 %v21, 4294901760
    %v204 = vsub.f32 %v21, %v203
    %205 = vmatpush.msra.mxu0 %v204
    %v206 = vand.u32 %v20, 4294901760
    %v207 = vsub.f32 %v20, %v206
    %208 = vmatpush.msra.mxu0 %v207
    %v209 = vand.u32 %v19, 4294901760
    %v210 = vsub.f32 %v19, %v209
    %211 = vmatpush.msra.mxu0 %v210
    %v212 = vand.u32 %v18, 4294901760
    %v213 = vsub.f32 %v18, %v212
    %214 = vmatpush.msra.mxu0 %v213
    %v215 = vand.u32 %v17, 4294901760
    %v216 = vsub.f32 %v17, %v215
    %217 = vmatpush.msra.mxu0 %v216
    %v218 = vand.u32 %v16, 4294901760
    %v219 = vsub.f32 %v16, %v218
    %220 = vmatpush.msra.mxu0 %v219
    %v221 = vand.u32 %v37, 4294901760
    %v222 = vsub.f32 %v37, %v221
    %223 = vmatmul.f32.gmra.mxu0 %v222
    %v224 = vpop.f32.mrf.mxu0
    %v225 = vadd.f32 %v173, %v224
    %226 = vdwg.mxu0
    %227 = vmatpush.msra.mxu0 0.0
    %v228 = vand.u32 %v30, 4294901760
    %229 = vmatpush.msra.mxu0 %v228
    %v230 = vand.u32 %v29, 4294901760
    %231 = vmatpush.msra.mxu0 %v230
    %v232 = vand.u32 %v28, 4294901760
    %233 = vmatpush.msra.mxu0 %v232
    %v234 = vand.u32 %v27, 4294901760
    %235 = vmatpush.msra.mxu0 %v234
    %v236 = vand.u32 %v26, 4294901760
    %237 = vmatpush.msra.mxu0 %v236
    %v238 = vand.u32 %v25, 4294901760
    %239 = vmatpush.msra.mxu0 %v238
    %v240 = vand.u32 %v24, 4294901760
    %241 = vmatpush.msra.mxu0 %v240
    %v242 = vand.u32 %v23, 4294901760
    %243 = vmatpush.msra.mxu0 %v242
    %v244 = vand.u32 %v22, 4294901760
    %245 = vmatpush.msra.mxu0 %v244
    %v246 = vand.u32 %v21, 4294901760
    %247 = vmatpush.msra.mxu0 %v246
    %v248 = vand.u32 %v20, 4294901760
    %249 = vmatpush.msra.mxu0 %v248
    %v250 = vand.u32 %v19, 4294901760
    %251 = vmatpush.msra.mxu0 %v250
    %v252 = vand.u32 %v18, 4294901760
    %253 = vmatpush.msra.mxu0 %v252
    %v254 = vand.u32 %v17, 4294901760
    %255 = vmatpush.msra.mxu0 %v254
    %v256 = vand.u32 %v16, 4294901760
    %257 = vmatpush.msra.mxu0 %v256
    %v258 = vand.u32 %v37, 4294901760
    %v259 = vsub.f32 %v37, %v258
    %v260 = vand.u32 %v259, 4294901760
    %261 = vmatmul.f32.gmra.mxu0 %v260
    %v262 = vpop.f32.mrf.mxu0
    %v263 = vadd.f32 %v225, %v262
    %264 = vdwg.mxu0
    %265 = vmatpush.msra.mxu0 0.0
    %v266 = vand.u32 %v30, 4294901760
    %v267 = vsub.f32 %v30, %v266
    %v268 = vand.u32 %v267, 4294901760
    %269 = vmatpush.msra.mxu0 %v268
    %v270 = vand.u32 %v29, 4294901760
    %v271 = vsub.f32 %v29, %v270
    %v272 = vand.u32 %v271, 4294901760
    %273 = vmatpush.msra.mxu0 %v272
    %v274 = vand.u32 %v28, 4294901760
    %v275 = vsub.f32 %v28, %v274
    %v276 = vand.u32 %v275, 4294901760
    %277 = vmatpush.msra.mxu0 %v276
    %v278 = vand.u32 %v27, 4294901760
    %v279 = vsub.f32 %v27, %v278
    %v280 = vand.u32 %v279, 4294901760
    %281 = vmatpush.msra.mxu0 %v280
    %v282 = vand.u32 %v26, 4294901760
    %v283 = vsub.f32 %v26, %v282
    %v284 = vand.u32 %v283, 4294901760
    %285 = vmatpush.msra.mxu0 %v284
    %v286 = vand.u32 %v25, 4294901760
    %v287 = vsub.f32 %v25, %v286
    %v288 = vand.u32 %v287, 4294901760
    %289 = vmatpush.msra.mxu0 %v288
    %v290 = vand.u32 %v24, 4294901760
    %v291 = vsub.f32 %v24, %v290
    %v292 = vand.u32 %v291, 4294901760
    %293 = vmatpush.msra.mxu0 %v292
    %v294 = vand.u32 %v23, 4294901760
    %v295 = vsub.f32 %v23, %v294
    %v296 = vand.u32 %v295, 4294901760
    %297 = vmatpush.msra.mxu0 %v296
    %v298 = vand.u32 %v22, 4294901760
    %v299 = vsub.f32 %v22, %v298
    %v300 = vand.u32 %v299, 4294901760
    %301 = vmatpush.msra.mxu0 %v300
    %v302 = vand.u32 %v21, 4294901760
    %v303 = vsub.f32 %v21, %v302
    %v304 = vand.u32 %v303, 4294901760
    %305 = vmatpush.msra.mxu0 %v304
    %v306 = vand.u32 %v20, 4294901760
    %v307 = vsub.f32 %v20, %v306
    %v308 = vand.u32 %v307, 4294901760
    %309 = vmatpush.msra.mxu0 %v308
    %v310 = vand.u32 %v19, 4294901760
    %v311 = vsub.f32 %v19, %v310
    %v312 = vand.u32 %v311, 4294901760
    %313 = vmatpush.msra.mxu0 %v312
    %v314 = vand.u32 %v18, 4294901760
    %v315 = vsub.f32 %v18, %v314
    %v316 = vand.u32 %v315, 4294901760
    %317 = vmatpush.msra.mxu0 %v316
    %v318 = vand.u32 %v17, 4294901760
    %v319 = vsub.f32 %v17, %v318
    %v320 = vand.u32 %v319, 4294901760
    %321 = vmatpush.msra.mxu0 %v320
    %v322 = vand.u32 %v16, 4294901760
    %v323 = vsub.f32 %v16, %v322
    %v324 = vand.u32 %v323, 4294901760
    %325 = vmatpush.msra.mxu0 %v324
    %v326 = vand.u32 %v37, 4294901760
    %327 = vmatmul.f32.gmra.mxu0 %v326
    %v328 = vpop.f32.mrf.mxu0
    %v329 = vadd.f32 %v263, %v328
    %330 = vdwg.mxu0
    %331 = vmatpush.msra.mxu0 0.0
    %v332 = vand.u32 %v30, 4294901760
    %333 = vmatpush.msra.mxu0 %v332
    %v334 = vand.u32 %v29, 4294901760
    %335 = vmatpush.msra.mxu0 %v334
    %v336 = vand.u32 %v28, 4294901760
    %337 = vmatpush.msra.mxu0 %v336
    %v338 = vand.u32 %v27, 4294901760
    %339 = vmatpush.msra.mxu0 %v338
    %v340 = vand.u32 %v26, 4294901760
    %341 = vmatpush.msra.mxu0 %v340
    %v342 = vand.u32 %v25, 4294901760
    %343 = vmatpush.msra.mxu0 %v342
    %v344 = vand.u32 %v24, 4294901760
    %345 = vmatpush.msra.mxu0 %v344
    %v346 = vand.u32 %v23, 4294901760
    %347 = vmatpush.msra.mxu0 %v346
    %v348 = vand.u32 %v22, 4294901760
    %349 = vmatpush.msra.mxu0 %v348
    %v350 = vand.u32 %v21, 4294901760
    %351 = vmatpush.msra.mxu0 %v350
    %v352 = vand.u32 %v20, 4294901760
    %353 = vmatpush.msra.mxu0 %v352
    %v354 = vand.u32 %v19, 4294901760
    %355 = vmatpush.msra.mxu0 %v354
    %v356 = vand.u32 %v18, 4294901760
    %357 = vmatpush.msra.mxu0 %v356
    %v358 = vand.u32 %v17, 4294901760
    %359 = vmatpush.msra.mxu0 %v358
    %v360 = vand.u32 %v16, 4294901760
    %361 = vmatpush.msra.mxu0 %v360
    %v362 = vand.u32 %v37, 4294901760
    %363 = vmatmul.f32.gmra.mxu0 %v362
    %v364 = vpop.f32.mrf.mxu0
    %v365 = vadd.f32 %v329, %v364
    %366 = vdwg.mxu0
    %vm367 = vcmask 146432
    %368 = vst.msk [vmem:[#allocation2] sm:$0xff] %vm367, %v365
    // Predicated region
    $region14: #{_forward_concat.1} parent=1 // pred_check
      _
    $region15: #{_forward_concat.1} parent=1 // pred_check_branch
      %370 = sbr.rel (0) target = $region17
    $region16: #{_forward_concat.1} parent=1 // pred_region
      %372 = vsyncadd [#allocation3], 0
      %s374 = sshll.u32 [#allocation2], 4
      %s375 = int_to_ptr.vmem [resolvable:$true] %s374
      %s376 = sshll.u32 %s3, 4
      %s377 = int_to_ptr.hbm [resolvable:$true] %s376
      %379 = dma.vmem_to_hbm [thread:$0]  %s375, 128, %s377, [#allocation3]
    $region17: #{_forward_concat.1} parent=1 // pred_fallthru
      _
    // Predicated region
    $region18: #{_forward_concat.1} parent=1 // pred_check
      _
    $region19: #{_forward_concat.1} parent=1 // pred_check_branch
      %381 = sbr.rel (0) target = $region21
    $region20: #{_forward_concat.1} parent=1 // pred_region
      %383 = dma.done [#allocation3], 128
    $region21: #{_forward_concat.1} parent=1 // pred_fallthru
      _
    %384 = vsyncpa [#allocation3], 1

</llo_original>
